<compile_context>
chip_gen: v5e
topology: v5e:2x2
jax: 0.10.0
libtpu: 0.0.40
codegen_flags: <defaults>
</compile_context>

<pallas_src>
import math
import jax
import jax.numpy as jnp
from jax.experimental import pallas as pl
from jax.experimental.pallas import tpu as pltpu


def _pe_add_kernel(x_ref, pe_ref, o_ref):
    # x_ref/o_ref: (B, lb) lane-dense slab; pe_ref: (1, lb) broadcast over rows.
    o_ref[...] = x_ref[...] + pe_ref[...]


def make_positional_encoding(outfea: int, max_len: int = 170, dtype=jnp.float32):
    """Deterministically build the pe buffer exactly as the PyTorch __init__ does."""
    position = jnp.arange(0, max_len, dtype=jnp.float32)[:, None]            # (max_len, 1)
    div_term = jnp.exp(
        jnp.arange(0, outfea, 2, dtype=jnp.float32) * (-(math.log(10000.0) / outfea))
    )                                                                          # (outfea//2,)
    angles = position * div_term                                               # (max_len, outfea//2)
    pe = jnp.zeros((max_len, outfea), dtype=jnp.float32)
    pe = pe.at[:, 0::2].set(jnp.sin(angles))
    pe = pe.at[:, 1::2].set(jnp.cos(angles))
    pe = pe[None, :, None, :]                                                  # (1, max_len, 1, outfea)
    return pe.astype(dtype)


def _pick_lane_block(P: int, row_bytes_per_lane: int, tile_cap_bytes: int = 2 << 20) -> int:
    """Largest multiple-of-128 divisor of P whose x-tile fits the byte cap,
    preferring at least 2 grid steps (v7x megacore sharding)."""
    q = P // 128
    divs = sorted({d for i in range(1, int(q ** 0.5) + 1) if q % i == 0
                   for d in (i, q // i)})
    best = 128
    for d in divs:
        lb = d * 128
        if lb * row_bytes_per_lane <= tile_cap_bytes and (P // lb) >= 2:
            best = max(best, lb)
    if best == 128:  # relax the >=2 steps preference if nothing qualified
        for d in divs:
            lb = d * 128
            if lb * row_bytes_per_lane <= tile_cap_bytes:
                best = max(best, lb)
    return best


def positional_encoding_s(x: jax.Array, pe: jax.Array, *,
                          force_pallas: bool = False,
                          tile_cap_bytes: int = 2 << 20) -> jax.Array:
    """x: (B, N, T, F); pe: (1, max_len, 1, F) with max_len >= N. Returns x + pe[:, :N]."""
    B, N, T, F = x.shape
    assert pe.ndim == 4 and pe.shape[0] == 1 and pe.shape[2] == 1 and pe.shape[3] == F, \
        f"pe shape {pe.shape} incompatible with (1, max_len, 1, {F})"
    assert pe.shape[1] >= N, f"pe max_len {pe.shape[1]} < N {N}"
    pe_n = pe[:, :N].astype(x.dtype)                     # (1, N, 1, F)

    P = N * T * F
    itemsize = jnp.dtype(x.dtype).itemsize
    too_small = x.size * itemsize < (1 << 20)
    if (P % 128 != 0) or (too_small and not force_pallas):
        # Tiny / lane-unfriendly shapes: let XLA fuse the broadcast add.
        return x + pe_n

    # Pre-broadcast pe over T once (cheap: N*T*F elems) -> one lane-dense row.
    pe_row = jnp.broadcast_to(pe_n, (1, N, T, F)).reshape(1, P)
    x2 = x.reshape(B, P)

    lb = _pick_lane_block(P, B * itemsize, tile_cap_bytes)
    grid = (P // lb,)

    out2 = pl.pallas_call(
        _pe_add_kernel,
        out_shape=jax.ShapeDtypeStruct((B, P), x.dtype),
        grid=grid,
        in_specs=[
            pl.BlockSpec((B, lb), lambda j: (0, j)),   # x slab: full batch rows, lane tile j
            pl.BlockSpec((1, lb), lambda j: (0, j)),   # pe row: same lane tile, broadcast over rows
        ],
        out_specs=pl.BlockSpec((B, lb), lambda j: (0, j)),
        compiler_params=pltpu.CompilerParams(
            dimension_semantics=("parallel",),
        ),
    )(x2, pe_row)
    return out2.reshape(B, N, T, F)


if __name__ == "__main__":
    key = jax.random.PRNGKey(0)

    # Small shapes consistent with the forward: B=2, N(max_len)=8, T=4, outfea=32.
    B, N, T, F = 2, 8, 4, 32
    x = jax.random.normal(key, (B, N, T, F), dtype=jnp.float32)
    pe = make_positional_encoding(outfea=F, max_len=N)
    out = jax.block_until_ready(positional_encoding_s(x, pe, force_pallas=True))
    ref = x + pe
    assert jnp.allclose(out, ref, atol=1e-6), "mismatch vs reference (small)"

    # Slightly larger, AGCRN-like shape (N=170 = module's default max_len) to
    # exercise the lane-tiled path with multiple grid steps.
    B2, N2, T2, F2 = 2, 170, 12, 64
    x2 = jax.random.normal(jax.random.PRNGKey(1), (B2, N2, T2, F2), dtype=jnp.float32)
    pe2 = make_positional_encoding(outfea=F2, max_len=170)
    out2 = jax.block_until_ready(positional_encoding_s(x2, pe2, force_pallas=True))
    ref2 = x2 + pe2[:, :N2]
    assert jnp.allclose(out2, ref2, atol=1e-6), "mismatch vs reference (large)"

    print("KERNEL_OK")
</pallas_src>

<mosaic_0001>
module attributes {stable_mosaic.version = 11 : i64} {
  func.func @_pe_add_kernel(%arg0: i32, %arg1: memref<2x512xf32, #tpu.memory_space<vmem>>, %arg2: memref<1x512xf32, #tpu.memory_space<vmem>>, %arg3: memref<2x512xf32, #tpu.memory_space<vmem>>) attributes {dimension_semantics = [#tpu.dimension_semantics<parallel>], iteration_bounds = array<i64: 2>, scalar_prefetch = 0 : i64, scratch_operands = 0 : i64, tpu.core_type = #tpu.core_type<tc>, window_params = [{transform_indices = @transform_0, window_bounds = array<i64: 2, 512>}, {transform_indices = @transform_1, window_bounds = array<i64: 1, 512>}, {transform_indices = @transform_2, window_bounds = array<i64: 2, 512>}]} {
    %c0 = arith.constant 0 : index
    %c0_0 = arith.constant 0 : index
    %0 = vector.load %arg1[%c0, %c0_0] : memref<2x512xf32, #tpu.memory_space<vmem>>, vector<2x512xf32>
    %c0_1 = arith.constant 0 : index
    %c0_2 = arith.constant 0 : index
    %1 = vector.load %arg2[%c0_1, %c0_2] : memref<1x512xf32, #tpu.memory_space<vmem>>, vector<1x512xf32>
    %2 = vector.broadcast %1 : vector<1x512xf32> to vector<2x512xf32>
    %3 = arith.addf %0, %2 : vector<2x512xf32>
    %c0_3 = arith.constant 0 : index
    %c0_4 = arith.constant 0 : index
    %4 = vector.load %arg3[%c0_3, %c0_4] : memref<2x512xf32, #tpu.memory_space<vmem>>, vector<2x512xf32>
    tpu.vector_store %arg3[%c0_3, %c0_4], %3 {strides = array<i32>} : memref<2x512xf32, #tpu.memory_space<vmem>>, vector<2x512xf32>,
    return
  }
  func.func @transform_0(%arg0: i32) -> (i32, i32) {
    %c0_i32 = arith.constant 0 : i32
    %c0_i32_0 = arith.constant 0 : i32
    return %c0_i32, %arg0 : i32, i32
  }
  func.func @transform_1(%arg0: i32) -> (i32, i32) {
    %c0_i32 = arith.constant 0 : i32
    %c0_i32_0 = arith.constant 0 : i32
    return %c0_i32, %arg0 : i32, i32
  }
  func.func @transform_2(%arg0: i32) -> (i32, i32) {
    %c0_i32 = arith.constant 0 : i32
    %c0_i32_0 = arith.constant 0 : i32
    return %c0_i32, %arg0 : i32, i32
  }
}

</mosaic_0001>

<llo_original>
// kernel: tpu_custom_call.1
$region0: #{tpu_custom_call.1}
  #allocation0 [shape = 'u32[]', space=smem, size = 0x4, offset = 0x4, fixed_abs, tag = 'smem constant byte address 0x4 - core index']
  #allocation1 [shape = 'u32[72,128]{1,0:T(1,128)}', space=vmem, size = 0x9000, scoped, tag = 'internal scratch']
  %s0 = inlined_call_operand.hbm [shape: f32[2,1024], index: 0, kind: input, shape index: {}]
  %s1 = inlined_call_operand.hbm [shape: f32[1,1024], index: 1, kind: input, shape index: {}]
  %s2 = inlined_call_operand.hbm [shape: f32[2,1024], index: 2, kind: output, shape index: {}]
  %s3 = sld [smem:[#allocation0]]
  $region49: #{tpu_custom_call.1} parent=0
    _
  %s5 = ssub.s32 1, %s3
  %s6 = scalar_select 0, %s5, %s3
  $region1: #{tpu_custom_call.1} parent=0
    #allocation2 [shape = 'u8[8192]{0}', space=vmem, size = 0x2000, scoped, tag = 'input window, operand 0']
    #allocation3 [shape = 's32[2]{0}', space=sflag, size = 0x8, scoped, tag = 'scoped memory for tpu_custom_call.1']
    #allocation4 [shape = 's32[2]{0}', space=sflag, size = 0x8, scoped, tag = 'scoped memory for tpu_custom_call.1']
    #allocation5 [shape = 'u8[4096]{0}', space=vmem, size = 0x1000, scoped, tag = 'input window, operand 1']
    #allocation6 [shape = 's32[2]{0}', space=sflag, size = 0x8, scoped, tag = 'scoped memory for tpu_custom_call.1']
    #allocation7 [shape = 'u8[8192]{0}', space=vmem, size = 0x2000, scoped, tag = 'output window, operand 0']
    %7 = vsyncpa [#allocation3], 0
    %s8 = scalar_lea.sflag [#allocation3], 1
    %9 = vsyncpa %s8, 0
    %10 = vsyncpa [#allocation6], 0
    %s11 = scalar_lea.sflag [#allocation6], 1
    %12 = vsyncpa %s11, 0
    %13 = vsyncpa [#allocation4], 0
    %s14 = scalar_lea.sflag [#allocation4], 1
    %15 = vsyncpa %s14, 0
    loop: start=0, step=1, limit=4
    $region2: #{tpu_custom_call.1} parent=1 // loop_pre_header
      _
    $region3: #{tpu_custom_call.1} parent=1 // loop_header
      %s17 = sphi 0, %s21
      %p18 = scmp.ge.s32.totalorder %s17, 4
      %s27 = sphi 0, %s29
      %s30 = sphi 0, %s27
      %s31 = sphi 0, %s30
      %s47 = sphi 0, %s31
      %s53 = sphi 0, %s55
      %s56 = sphi 0, %s53
      %s57 = sphi 0, %s56
      %s73 = sphi 0, %s57
      %s79 = sphi 0, %s81
      %s82 = sphi 0, %s79
      %s83 = sphi 0, %s82
      %s99 = sphi 0, %s83
    $region4: #{tpu_custom_call.1} parent=1 // loop_header_branch
      %20 = sbr.rel (%p18) target = $region8
    $region5: #{tpu_custom_call.1} parent=1 // loop_body
      %s22 = ssub.s32 %s17, 1
      %s23 = ssub.s32 %s17, 2
      %s24 = sadd.s32 %s17, 1
      %s25 = ssub.s32 %s17, %s24
      %p26 = scmp.eq.s32.totalorder %s25, 0
      %s28 = sadd.s32 %s27, 1
      %s29 = scalar_select %p26, %s27, %s28
      %p32 = pneg %p26
      %p33 = scmp.eq.s32.totalorder %s17, 1
      %p34 = por %p32, %p33
      %p35 = scmp.ne.s32.totalorder %s27, %s30
      %p36 = scmp.eq.s32.totalorder %s17, 0
      %p37 = por %p35, %p36
      %p38 = scmp.ne.s32.totalorder %s27, %s30
      %p39 = scmp.eq.s32.totalorder %s22, 1
      %p40 = por %p38, %p39
      %p41 = scmp.ne.s32.totalorder %s30, %s31
      %p42 = scmp.eq.s32.totalorder %s22, 0
      %p43 = por %p41, %p42
      %p44 = scmp.ne.s32.totalorder %s30, %s31
      %p45 = scmp.eq.s32.totalorder %s23, 1
      %p46 = por %p44, %p45
      %p48 = scmp.ne.s32.totalorder %s31, %s47
      %p49 = scmp.eq.s32.totalorder %s23, 0
      %p50 = por %p48, %p49
      %s51 = ssub.s32 %s17, %s24
      %p52 = scmp.eq.s32.totalorder %s51, 0
      %s54 = sadd.s32 %s53, 1
      %s55 = scalar_select %p52, %s53, %s54
      %p58 = pneg %p52
      %p59 = scmp.eq.s32.totalorder %s17, 1
      %p60 = por %p58, %p59
      %p61 = scmp.ne.s32.totalorder %s53, %s56
      %p62 = scmp.eq.s32.totalorder %s17, 0
      %p63 = por %p61, %p62
      %p64 = scmp.ne.s32.totalorder %s53, %s56
      %p65 = scmp.eq.s32.totalorder %s22, 1
      %p66 = por %p64, %p65
      %p67 = scmp.ne.s32.totalorder %s56, %s57
      %p68 = scmp.eq.s32.totalorder %s22, 0
      %p69 = por %p67, %p68
      %p70 = scmp.ne.s32.totalorder %s56, %s57
      %p71 = scmp.eq.s32.totalorder %s23, 1
      %p72 = por %p70, %p71
      %p74 = scmp.ne.s32.totalorder %s57, %s73
      %p75 = scmp.eq.s32.totalorder %s23, 0
      %p76 = por %p74, %p75
      %s77 = ssub.s32 %s17, %s24
      %p78 = scmp.eq.s32.totalorder %s77, 0
      %s80 = sadd.s32 %s79, 1
      %s81 = scalar_select %p78, %s79, %s80
      %p84 = pneg %p78
      %p85 = scmp.eq.s32.totalorder %s17, 1
      %p86 = por %p84, %p85
      %p87 = scmp.ne.s32.totalorder %s79, %s82
      %p88 = scmp.eq.s32.totalorder %s17, 0
      %p89 = por %p87, %p88
      %p90 = scmp.ne.s32.totalorder %s79, %s82
      %p91 = scmp.eq.s32.totalorder %s22, 1
      %p92 = por %p90, %p91
      %p93 = scmp.ne.s32.totalorder %s82, %s83
      %p94 = scmp.eq.s32.totalorder %s22, 0
      %p95 = por %p93, %p94
      %p96 = scmp.ne.s32.totalorder %s82, %s83
      %p97 = scmp.eq.s32.totalorder %s23, 1
      %p98 = por %p96, %p97
      %p100 = scmp.ne.s32.totalorder %s83, %s99
      %p101 = scmp.eq.s32.totalorder %s23, 0
      %p102 = por %p100, %p101
      %p103 = scmp.le.s32.totalorder 1, %s17
      %p104 = scmp.lt.s32.totalorder %s17, 3
      %p105 = pnand %p103, %p104
      %p106 = pneg %p105
      // Predicated region
      $region9: #{tpu_custom_call.1} parent=5 // pred_check
        _
      $region10: #{tpu_custom_call.1} parent=5 // pred_check_branch
        %108 = sbr.rel (%p105) target = $region12
      $region11: #{tpu_custom_call.1} parent=5 // pred_region
        %s109 = ssub.s32 %s17, 1
      $region12: #{tpu_custom_call.1} parent=5 // pred_fallthru
        _
      %p110 = scmp.lt.s32.totalorder %s17, 2
      // Predicated region
      $region13: #{tpu_custom_call.1} parent=5 // pred_check
        %p111 = pneg %p110
      $region14: #{tpu_custom_call.1} parent=5 // pred_check_branch
        %113 = sbr.rel (%p111) target = $region16
      $region15: #{tpu_custom_call.1} parent=5 // pred_region
        // Predicated region
        $region17: #{tpu_custom_call.1} parent=15 // pred_check
          %p114 = pneg %p37
        $region18: #{tpu_custom_call.1} parent=15 // pred_check_branch
          %116 = sbr.rel (%p114) target = $region20
        $region19: #{tpu_custom_call.1} parent=15 // pred_region
          %s117 = sand.u32 %s27, 1
          %s118 = scalar_lea.sflag [#allocation3], %s117
          %s119 = sand.u32 %s27, 1
          %s120 = smul.addr %s119, 8
          %s121 = scalar_lea.vmem [#allocation2], %s120
          %s122 = smul.u32 4, %s17
          %124 = vsyncadd %s118, 0
          %s125 = smul.addr %s122, 2
          %s126 = scalar_lea.hbm %s0, %s125
          %s128 = sshll.u32 %s126, 4
          %s129 = int_to_ptr.hbm [resolvable:$true] %s128
          %s130 = sshll.u32 %s121, 4
          %s131 = int_to_ptr.vmem [resolvable:$true] %s130
          %133 = dma.hbm_to_vmem [thread:$0]  %s129, 128, %s131, %s118
        $region20: #{tpu_custom_call.1} parent=15 // pred_fallthru
          _
        // Predicated region
        $region21: #{tpu_custom_call.1} parent=15 // pred_check
          %p134 = pneg %p63
        $region22: #{tpu_custom_call.1} parent=15 // pred_check_branch
          %136 = sbr.rel (%p134) target = $region24
        $region23: #{tpu_custom_call.1} parent=15 // pred_region
          %s137 = sand.u32 %s53, 1
          %s138 = scalar_lea.sflag [#allocation6], %s137
          %s139 = sand.u32 %s53, 1
          %s140 = smul.addr %s139, 4
          %s141 = scalar_lea.vmem [#allocation5], %s140
          %s142 = smul.u32 4, %s17
          %144 = vsyncadd %s138, 0
          %s145 = scalar_lea.hbm %s1, %s142
          %s147 = sshll.u32 %s145, 4
          %s148 = int_to_ptr.hbm [resolvable:$true] %s147
          %s149 = sshll.u32 %s141, 4
          %s150 = int_to_ptr.vmem [resolvable:$true] %s149
          %152 = dma.hbm_to_vmem [thread:$0]  %s148, 64, %s150, %s138
        $region24: #{tpu_custom_call.1} parent=15 // pred_fallthru
          _
      $region16: #{tpu_custom_call.1} parent=5 // pred_fallthru
        _
      %p153 = scmp.le.s32.totalorder 1, %s17
      %p154 = scmp.lt.s32.totalorder %s17, 3
      %p155 = pnand %p153, %p154
      %p156 = pneg %p155
      // Predicated region
      $region25: #{tpu_custom_call.1} parent=5 // pred_check
        _
      $region26: #{tpu_custom_call.1} parent=5 // pred_check_branch
        %158 = sbr.rel (%p155) target = $region28
      $region27: #{tpu_custom_call.1} parent=5 // pred_region
        %s159 = ssub.s32 %s17, 1
        %s160 = sand.u32 %s30, 1
        %s161 = scalar_lea.sflag [#allocation3], %s160
        %s162 = sand.u32 %s30, 1
        %s163 = smul.addr %s162, 8
        %s164 = scalar_lea.vmem [#allocation2], %s163
        // Predicated region
        $region29: #{tpu_custom_call.1} parent=27 // pred_check
          %p165 = pneg %p43
        $region30: #{tpu_custom_call.1} parent=27 // pred_check_branch
          %167 = sbr.rel (%p165) target = $region32
        $region31: #{tpu_custom_call.1} parent=27 // pred_region
          %169 = dma.done %s161, 128
        $region32: #{tpu_custom_call.1} parent=27 // pred_fallthru
          _
        %s170 = sand.u32 %s56, 1
        %s171 = scalar_lea.sflag [#allocation6], %s170
        %s172 = sand.u32 %s56, 1
        %s173 = smul.addr %s172, 4
        %s174 = scalar_lea.vmem [#allocation5], %s173
        // Predicated region
        $region33: #{tpu_custom_call.1} parent=27 // pred_check
          %p175 = pneg %p69
        $region34: #{tpu_custom_call.1} parent=27 // pred_check_branch
          %177 = sbr.rel (%p175) target = $region36
        $region35: #{tpu_custom_call.1} parent=27 // pred_region
          %179 = dma.done %s171, 64
        $region36: #{tpu_custom_call.1} parent=27 // pred_fallthru
          _
        %s180 = sand.u32 %s30, 1
        %s181 = scalar_lea.sflag [#allocation3], %s180
        %s182 = sand.u32 %s30, 1
        %s183 = smul.addr %s182, 8
        %s184 = scalar_lea.vmem [#allocation2], %s183
        %p185 = pneg %p43
        %p186 = pneg %p40
        %s187 = sand.u32 %s56, 1
        %s188 = scalar_lea.sflag [#allocation6], %s187
        %s189 = sand.u32 %s56, 1
        %s190 = smul.addr %s189, 4
        %s191 = scalar_lea.vmem [#allocation5], %s190
        %p192 = pneg %p69
        %p193 = pneg %p66
        %p194 = pneg %p95
        %p195 = pneg %p92
        %s196 = sand.u32 %s82, 1
        %s197 = scalar_lea.sflag [#allocation4], %s196
        %s198 = sand.u32 %s82, 1
        %s199 = smul.addr %s198, 8
        %s200 = scalar_lea.vmem [#allocation7], %s199
        %s201 = smul.u32 4, %s22
        %s202 = smul.u32 4, %s22
        %s203 = smul.u32 4, %s22
        %v204 = vld [vmem:[%s164] sm:$0xff]
        %v205 = vld [vmem:[%s174] sm:$0xf]
        %v207 = vperm.slane %v205, 0
        %v208 = vperm.slane %v205, 1
        %v209 = vperm.slane %v205, 2
        %v210 = vperm.slane %v205, 3
        %v211 = vrot.slane %v208, 6
        %v212 = vrot.slane %v209, 4
        %v213 = vrot.slane %v210, 2
        %vm214 = vcmask 1041408
        %v215 = vsel %vm214, %v207, %v211
        %vm216 = vcmask 1045508
        %v217 = vsel %vm216, %v212, %v213
        %vm218 = vcmask 1043456
        %v219 = vsel %vm218, %v215, %v217
        %v221 = vadd.f32 %v204, %v219
        %222 = vst [vmem:[%s200] sm:$0xff] %v221
        %s223 = sand.u32 %s82, 1
        %s224 = scalar_lea.sflag [#allocation4], %s223
        %s225 = sand.u32 %s82, 1
        %s226 = smul.addr %s225, 8
        %s227 = scalar_lea.vmem [#allocation7], %s226
        // Predicated region
        $region37: #{tpu_custom_call.1} parent=27 // pred_check
          %p228 = pneg %p92
        $region38: #{tpu_custom_call.1} parent=27 // pred_check_branch
          %230 = sbr.rel (%p228) target = $region40
        $region39: #{tpu_custom_call.1} parent=27 // pred_region
          %s231 = smul.u32 4, %s22
          %233 = vsyncadd %s224, 0
          %s234 = smul.addr %s231, 2
          %s235 = scalar_lea.hbm %s2, %s234
          %s237 = sshll.u32 %s227, 4
          %s238 = int_to_ptr.vmem [resolvable:$true] %s237
          %s239 = sshll.u32 %s235, 4
          %s240 = int_to_ptr.hbm [resolvable:$true] %s239
          %242 = dma.vmem_to_hbm [thread:$0]  %s238, 128, %s240, %s224
        $region40: #{tpu_custom_call.1} parent=27 // pred_fallthru
          _
      $region28: #{tpu_custom_call.1} parent=5 // pred_fallthru
        _
      %p243 = scmp.le.s32.totalorder 2, %s17
      // Predicated region
      $region41: #{tpu_custom_call.1} parent=5 // pred_check
        %p244 = pneg %p243
      $region42: #{tpu_custom_call.1} parent=5 // pred_check_branch
        %246 = sbr.rel (%p244) target = $region44
      $region43: #{tpu_custom_call.1} parent=5 // pred_region
        %s247 = ssub.s32 %s17, 2
        // Predicated region
        $region45: #{tpu_custom_call.1} parent=43 // pred_check
          %p248 = pneg %p98
        $region46: #{tpu_custom_call.1} parent=43 // pred_check_branch
          %250 = sbr.rel (%p248) target = $region48
        $region47: #{tpu_custom_call.1} parent=43 // pred_region
          %s251 = sand.u32 %s83, 1
          %s252 = scalar_lea.sflag [#allocation4], %s251
          %s253 = sand.u32 %s83, 1
          %s254 = smul.addr %s253, 8
          %s255 = scalar_lea.vmem [#allocation7], %s254
          %257 = dma.done %s252, 128
        $region48: #{tpu_custom_call.1} parent=43 // pred_fallthru
          _
      $region44: #{tpu_custom_call.1} parent=5 // pred_fallthru
        _
    $region6: #{tpu_custom_call.1} parent=1 // loop_footer
      %s21 = sadd.s32 1, %s17
    $region7: #{tpu_custom_call.1} parent=1 // loop_footer_branch
      %16 = sbr.rel target = $region3
    $region8: #{tpu_custom_call.1} parent=1 // loop_exit
      _
    %258 = vsyncpa [#allocation3], 1
    %s259 = scalar_lea.sflag [#allocation3], 1
    %260 = vsyncpa %s259, 1
    %261 = vsyncpa [#allocation6], 1
    %s262 = scalar_lea.sflag [#allocation6], 1
    %263 = vsyncpa %s262, 1
    %264 = vsyncpa [#allocation4], 1
    %s265 = scalar_lea.sflag [#allocation4], 1
    %266 = vsyncpa %s265, 1

</llo_original>
